<compile_context>
chip_gen: v5e
topology: v5e:2x2
jax: 0.10.0
libtpu: 0.0.40
codegen_flags: <defaults>
</compile_context>

<pallas_src>
import functools

import jax
import jax.numpy as jnp
from jax import lax
from jax.experimental import pallas as pl
from jax.experimental.pallas import tpu as pltpu


def _bert_output_kernel(h_ref, w_ref, b_ref, res_ref, gamma_ref, beta_ref,
                        o_ref, *, eps):
    # h_ref:   (TM, I)  activations from the intermediate layer (streamed)
    # w_ref:   (I,  H)  dense weight (transposed for x @ W), VMEM-resident
    # b_ref:   (1,  H)  dense bias (resident)
    # res_ref: (TM, H)  residual input_tensor tile (streamed)
    # gamma_ref / beta_ref: (1, H) LayerNorm affine params (resident)
    # o_ref:   (TM, H)
    #
    # Dense: input dtype straight to the MXU, f32 accumulation.
    y = jnp.dot(h_ref[...], w_ref[...], preferred_element_type=jnp.float32)

    # Dropout is identity in eval mode.
    # TODO(synk): training-mode dropout would need pltpu.prng_seed /
    # prng_random_bits and a mask; not part of this inference forward pass.

    # Fold bias + residual into a single f32 add pass before the reductions.
    y = y + (res_ref[...].astype(jnp.float32) + b_ref[...].astype(jnp.float32))

    # LayerNorm over the hidden axis; f32 epilogue, rsqrt on the EUP.
    mean = jnp.mean(y, axis=-1, keepdims=True)
    centered = y - mean
    var = jnp.mean(centered * centered, axis=-1, keepdims=True)
    inv = lax.rsqrt(var + eps)
    out = centered * inv * gamma_ref[...].astype(jnp.float32) \
          + beta_ref[...].astype(jnp.float32)
    o_ref[...] = out.astype(o_ref.dtype)


def _vmem_capacity_bytes():
    """Physical VMEM per core; conservative 64 MiB fallback (v7x-sized)."""
    try:
        info = pltpu.get_tpu_info()
        for name in ("vmem_capacity_bytes", "vmem_size_bytes", "vmem_bytes"):
            v = getattr(info, name, None)
            if v:
                return int(v)
    except Exception:
        pass
    return 64 * 1024 * 1024


def _round_down(x, m):
    return max(m, (x // m) * m)


def _round_up(x, m):
    return ((x + m - 1) // m) * m


def _pick_tile_rows(M, I, H, act_itemsize, out_itemsize, block_m, stream_budget):
    """Row tile: sublane-aligned, VMEM-budgeted, >=2 grid steps for large M."""
    sub = 8 if act_itemsize >= 4 else (16 if act_itemsize == 2 else 32)
    if block_m is not None:
        tm = _round_down(int(block_m), sub)
    else:
        tm = sub
        for cand in (1024, 768, 512, 384, 256, 128, 64, 32, 16, 8):
            if cand % sub:
                continue
            per_step = (2 * cand * I * act_itemsize      # activation, 2 bufs
                        + 2 * cand * H * act_itemsize    # residual,   2 bufs
                        + 2 * cand * H * out_itemsize    # output,     2 bufs
                        + 4 * cand * H * 4)              # f32 epilogue temps
            if per_step <= stream_budget:
                tm = cand
                break
    # Keep at least 2 row tiles for large M so a dual-TC part (v7x) can split
    # the "parallel" grid axis; negligible cost on single-TC v5e/v6e.
    if M >= 512:
        tm = min(tm, _round_up(pl.cdiv(M, 2), sub))
    return min(tm, M)


def bert_output(hidden_states, input_tensor, params, *, eps=1e-12,
                block_m=None):
    """hidden_states: [B, S, I], input_tensor: [B, S, H] -> [B, S, H]."""
    B, S, I = hidden_states.shape
    H = input_tensor.shape[-1]
    M = B * S

    h2d = hidden_states.reshape(M, I)
    r2d = input_tensor.reshape(M, H)
    w = params["dense_w"]                       # (I, H), laid out for x @ W
    b = params["dense_b"].reshape(1, H)
    gamma = params["ln_gamma"].reshape(1, H)
    beta = params["ln_beta"].reshape(1, H)
    out_dtype = hidden_states.dtype

    # Per-generation VMEM budget: ~75% of physical, capped at 96 MiB
    # (-> ~96 MiB on 128 MiB v5e/v6e, ~48 MiB on 64 MiB-per-TC v7x).
    vmem_cap = _vmem_capacity_bytes()
    vmem_limit = min(int(0.75 * vmem_cap), 96 * 1024 * 1024)

    resident_bytes = (w.size * w.dtype.itemsize + b.size * b.dtype.itemsize
                      + gamma.size * gamma.dtype.itemsize
                      + beta.size * beta.dtype.itemsize)
    stream_budget = max(vmem_limit - resident_bytes - (4 << 20), 4 << 20)

    TM = _pick_tile_rows(M, I, H, h2d.dtype.itemsize,
                         jnp.dtype(out_dtype).itemsize, block_m, stream_budget)
    grid = (pl.cdiv(M, TM),)   # ragged last tile handled in-kernel (masked store)

    bytes_accessed = (h2d.size * h2d.dtype.itemsize
                      + r2d.size * r2d.dtype.itemsize
                      + resident_bytes
                      + M * H * jnp.dtype(out_dtype).itemsize)
    cost = pl.CostEstimate(
        flops=2 * M * I * H + 10 * M * H,
        transcendentals=M,
        bytes_accessed=int(bytes_accessed),
    )

    kernel = functools.partial(_bert_output_kernel, eps=eps)

    def _resident_spec(shape, mode):
        if mode is None:
            return pl.BlockSpec(shape, lambda i: (0, 0))
        return pl.BlockSpec(shape, lambda i: (0, 0), pipeline_mode=mode)

    def _build(mode):
        return pl.pallas_call(
            kernel,
            out_shape=jax.ShapeDtypeStruct((M, H), out_dtype),
            grid_spec=pltpu.PrefetchScalarGridSpec(
                num_scalar_prefetch=0,
                grid=grid,
                in_specs=[
                    pl.BlockSpec((TM, I), lambda i: (i, 0)),   # activations
                    _resident_spec((I, H), mode),              # weight
                    _resident_spec((1, H), mode),              # bias
                    pl.BlockSpec((TM, H), lambda i: (i, 0)),   # residual
                    _resident_spec((1, H), mode),              # gamma
                    _resident_spec((1, H), mode),              # beta
                ],
                out_specs=pl.BlockSpec((TM, H), lambda i: (i, 0)),
            ),
            compiler_params=pltpu.CompilerParams(
                dimension_semantics=("parallel",),   # shard row tiles across TCs
                vmem_limit_bytes=int(vmem_limit),
            ),
            cost_estimate=cost,
        )

    try:
        # Single-buffer the grid-invariant operands (halves weight VMEM).
        out2d = _build(pl.Buffered(1))(h2d, w, b, r2d, gamma, beta)
    except Exception:
        # Fallback: default double buffering for the resident operands.
        out2d = _build(None)(h2d, w, b, r2d, gamma, beta)

    return out2d.reshape(B, S, H)


def _reference(hidden_states, input_tensor, params, eps=1e-12):
    y = jnp.einsum("bsi,ih->bsh", hidden_states.astype(jnp.float32),
                   params["dense_w"].astype(jnp.float32),
                   precision=lax.Precision.HIGHEST)
    y = y + params["dense_b"].astype(jnp.float32)
    y = y + input_tensor.astype(jnp.float32)
    mean = jnp.mean(y, axis=-1, keepdims=True)
    var = jnp.mean((y - mean) ** 2, axis=-1, keepdims=True)
    normed = (y - mean) / jnp.sqrt(var + eps)
    return normed * params["ln_gamma"].astype(jnp.float32) \
           + params["ln_beta"].astype(jnp.float32)


def _make_params(key, I, H, dtype):
    k3, k4, k5 = jax.random.split(key, 3)
    return {
        # nn.Linear(intermediate_size, hidden_size): torch weight (H, I);
        # stored transposed as (I, H) for x @ W.
        "dense_w": (jax.random.normal(k3, (I, H), dtype=jnp.float32)
                    * 0.02).astype(dtype),
        "dense_b": (jax.random.normal(k4, (H,), dtype=jnp.float32) * 0.02),
        "ln_gamma": (jnp.ones((H,), dtype=jnp.float32)
                     + 0.1 * jax.random.normal(k5, (H,), dtype=jnp.float32)),
        "ln_beta": jnp.zeros((H,), dtype=jnp.float32),
    }


if __name__ == "__main__":
    eps = 1e-12
    key = jax.random.PRNGKey(0)

    # ---- Test 1: small f32 config (batch=2, seq=8, hidden=32, inter=64) ----
    B, S, H, I = 2, 8, 32, 64
    k1, k2, kp = jax.random.split(key, 3)
    hidden_states = jax.random.normal(k1, (B, S, I), dtype=jnp.float32)
    input_tensor = jax.random.normal(k2, (B, S, H), dtype=jnp.float32)
    params = _make_params(kp, I, H, jnp.float32)

    out = jax.block_until_ready(bert_output(hidden_states, input_tensor,
                                            params, eps=eps))
    ref = _reference(hidden_states, input_tensor, params, eps=eps)
    assert out.shape == (B, S, H)
    assert jnp.allclose(out, ref, atol=1e-2, rtol=1e-2), "f32 mismatch"

    # ---- Test 2: bf16 inputs, multi-tile grid (M=512 -> 2 row tiles) ----
    B2, S2, H2, I2 = 2, 256, 128, 128
    k1b, k2b, kpb = jax.random.split(jax.random.PRNGKey(1), 3)
    hs_bf = jax.random.normal(k1b, (B2, S2, I2), dtype=jnp.float32).astype(jnp.bfloat16)
    it_bf = jax.random.normal(k2b, (B2, S2, H2), dtype=jnp.float32).astype(jnp.bfloat16)
    params_bf = _make_params(kpb, I2, H2, jnp.bfloat16)

    out_bf = jax.block_until_ready(bert_output(hs_bf, it_bf, params_bf, eps=eps))
    ref_bf = _reference(hs_bf, it_bf, params_bf, eps=eps)
    assert out_bf.shape == (B2, S2, H2)
    assert jnp.allclose(out_bf.astype(jnp.float32), ref_bf,
                        atol=5e-2, rtol=5e-2), "bf16 mismatch"

    # ---- Test 3: ragged last row tile (M=336, TM=128 -> masked boundary) ----
    B3, S3, H3, I3 = 3, 112, 128, 256
    k1c, k2c, kpc = jax.random.split(jax.random.PRNGKey(2), 3)
    hs3 = jax.random.normal(k1c, (B3, S3, I3), dtype=jnp.float32)
    it3 = jax.random.normal(k2c, (B3, S3, H3), dtype=jnp.float32)
    params3 = _make_params(kpc, I3, H3, jnp.float32)

    out3 = jax.block_until_ready(bert_output(hs3, it3, params3, eps=eps,
                                             block_m=128))
    ref3 = _reference(hs3, it3, params3, eps=eps)
    assert out3.shape == (B3, S3, H3)
    assert jnp.allclose(out3, ref3, atol=1e-2, rtol=1e-2), "ragged-tile mismatch"

    print("KERNEL_OK")
</pallas_src>

<mosaic_0001>
module attributes {stable_mosaic.version = 11 : i64} {
  func.func @_bert_output_kernel(%arg0: i32, %arg1: memref<16x64xf32, #tpu.memory_space<vmem>>, %arg2: memref<64x32xf32, #tpu.memory_space<vmem>>, %arg3: memref<1x32xf32, #tpu.memory_space<vmem>>, %arg4: memref<16x32xf32, #tpu.memory_space<vmem>>, %arg5: memref<1x32xf32, #tpu.memory_space<vmem>>, %arg6: memref<1x32xf32, #tpu.memory_space<vmem>>, %arg7: memref<16x32xf32, #tpu.memory_space<vmem>>) attributes {dimension_semantics = [#tpu.dimension_semantics<parallel>], iteration_bounds = array<i64: 1>, scalar_prefetch = 0 : i64, scratch_operands = 0 : i64, tpu.core_type = #tpu.core_type<tc>, window_params = [{transform_indices = @transform_0, window_bounds = array<i64: 16, 64>}, {pipeline_mode = #tpu.pipeline_mode<synchronous>, transform_indices = @transform_1, window_bounds = array<i64: 64, 32>}, {pipeline_mode = #tpu.pipeline_mode<synchronous>, transform_indices = @transform_2, window_bounds = array<i64: 1, 32>}, {transform_indices = @transform_3, window_bounds = array<i64: 16, 32>}, {pipeline_mode = #tpu.pipeline_mode<synchronous>, transform_indices = @transform_4, window_bounds = array<i64: 1, 32>}, {pipeline_mode = #tpu.pipeline_mode<synchronous>, transform_indices = @transform_5, window_bounds = array<i64: 1, 32>}, {transform_indices = @transform_6, window_bounds = array<i64: 16, 32>}]} {
    %c0 = arith.constant 0 : index
    %c0_0 = arith.constant 0 : index
    %0 = vector.load %arg1[%c0, %c0_0] : memref<16x64xf32, #tpu.memory_space<vmem>>, vector<16x64xf32>
    %c0_1 = arith.constant 0 : index
    %c0_2 = arith.constant 0 : index
    %1 = vector.load %arg2[%c0_1, %c0_2] : memref<64x32xf32, #tpu.memory_space<vmem>>, vector<64x32xf32>
    %cst = arith.constant dense<0.000000e+00> : vector<16x32xf32>
    %2 = tpu.matmul %0, %1, %cst {dimension_numbers = #tpu.dot_dimension_numbers<[1], [0], [0], [1], [0, 0, 1, 1], [], []>} : vector<16x64xf32>, vector<64x32xf32>, vector<16x32xf32> -> vector<16x32xf32>
    %c0_3 = arith.constant 0 : index
    %c0_4 = arith.constant 0 : index
    %3 = vector.load %arg4[%c0_3, %c0_4] : memref<16x32xf32, #tpu.memory_space<vmem>>, vector<16x32xf32>
    %c0_5 = arith.constant 0 : index
    %c0_6 = arith.constant 0 : index
    %4 = vector.load %arg3[%c0_5, %c0_6] : memref<1x32xf32, #tpu.memory_space<vmem>>, vector<1x32xf32>
    %5 = vector.broadcast %4 : vector<1x32xf32> to vector<16x32xf32>
    %6 = arith.addf %3, %5 : vector<16x32xf32>
    %7 = arith.addf %2, %6 : vector<16x32xf32>
    %cst_7 = arith.constant dense<0.000000e+00> : vector<16xf32>
    %8 = vector.multi_reduction <add>, %7, %cst_7 [1] : vector<16x32xf32> to vector<16xf32>
    %9 = vector.shape_cast %8 : vector<16xf32> to vector<16x1xf32>
    %cst_8 = arith.constant 3.200000e+01 : f32
    %10 = vector.broadcast %cst_8 : f32 to vector<16x1xf32>
    %11 = arith.divf %9, %10 : vector<16x1xf32>
    %12 = vector.broadcast %11 : vector<16x1xf32> to vector<16x32xf32>
    %13 = arith.subf %7, %12 : vector<16x32xf32>
    %14 = arith.mulf %13, %13 : vector<16x32xf32>
    %cst_9 = arith.constant dense<0.000000e+00> : vector<16xf32>
    %15 = vector.multi_reduction <add>, %14, %cst_9 [1] : vector<16x32xf32> to vector<16xf32>
    %16 = vector.shape_cast %15 : vector<16xf32> to vector<16x1xf32>
    %cst_10 = arith.constant 3.200000e+01 : f32
    %17 = vector.broadcast %cst_10 : f32 to vector<16x1xf32>
    %18 = arith.divf %16, %17 : vector<16x1xf32>
    %cst_11 = arith.constant 9.99999996E-13 : f32
    %19 = vector.broadcast %cst_11 : f32 to vector<16x1xf32>
    %20 = arith.addf %18, %19 : vector<16x1xf32>
    %21 = math.rsqrt %20 : vector<16x1xf32>
    %22 = vector.broadcast %21 : vector<16x1xf32> to vector<16x32xf32>
    %23 = arith.mulf %13, %22 : vector<16x32xf32>
    %c0_12 = arith.constant 0 : index
    %c0_13 = arith.constant 0 : index
    %24 = vector.load %arg5[%c0_12, %c0_13] : memref<1x32xf32, #tpu.memory_space<vmem>>, vector<1x32xf32>
    %25 = vector.broadcast %24 : vector<1x32xf32> to vector<16x32xf32>
    %26 = arith.mulf %23, %25 : vector<16x32xf32>
    %c0_14 = arith.constant 0 : index
    %c0_15 = arith.constant 0 : index
    %27 = vector.load %arg6[%c0_14, %c0_15] : memref<1x32xf32, #tpu.memory_space<vmem>>, vector<1x32xf32>
    %28 = vector.broadcast %27 : vector<1x32xf32> to vector<16x32xf32>
    %29 = arith.addf %26, %28 : vector<16x32xf32>
    %c0_16 = arith.constant 0 : index
    %c0_17 = arith.constant 0 : index
    %30 = vector.load %arg7[%c0_16, %c0_17] : memref<16x32xf32, #tpu.memory_space<vmem>>, vector<16x32xf32>
    tpu.vector_store %arg7[%c0_16, %c0_17], %29 {strides = array<i32>} : memref<16x32xf32, #tpu.memory_space<vmem>>, vector<16x32xf32>,
    return
  }
  func.func @transform_0(%arg0: i32) -> (i32, i32) {
    %c0_i32 = arith.constant 0 : i32
    %c0_i32_0 = arith.constant 0 : i32
    return %arg0, %c0_i32 : i32, i32
  }
  func.func @transform_1(%arg0: i32) -> (i32, i32) {
    %c0_i32 = arith.constant 0 : i32
    %c0_i32_0 = arith.constant 0 : i32
    %c0_i32_1 = arith.constant 0 : i32
    return %c0_i32, %c0_i32_0 : i32, i32
  }
  func.func @transform_2(%arg0: i32) -> (i32, i32) {
    %c0_i32 = arith.constant 0 : i32
    %c0_i32_0 = arith.constant 0 : i32
    %c0_i32_1 = arith.constant 0 : i32
    return %c0_i32, %c0_i32_0 : i32, i32
  }
  func.func @transform_3(%arg0: i32) -> (i32, i32) {
    %c0_i32 = arith.constant 0 : i32
    %c0_i32_0 = arith.constant 0 : i32
    return %arg0, %c0_i32 : i32, i32
  }
  func.func @transform_4(%arg0: i32) -> (i32, i32) {
    %c0_i32 = arith.constant 0 : i32
    %c0_i32_0 = arith.constant 0 : i32
    %c0_i32_1 = arith.constant 0 : i32
    return %c0_i32, %c0_i32_0 : i32, i32
  }
  func.func @transform_5(%arg0: i32) -> (i32, i32) {
    %c0_i32 = arith.constant 0 : i32
    %c0_i32_0 = arith.constant 0 : i32
    %c0_i32_1 = arith.constant 0 : i32
    return %c0_i32, %c0_i32_0 : i32, i32
  }
  func.func @transform_6(%arg0: i32) -> (i32, i32) {
    %c0_i32 = arith.constant 0 : i32
    %c0_i32_0 = arith.constant 0 : i32
    return %arg0, %c0_i32 : i32, i32
  }
}

module attributes {stable_mosaic.version = 11 : i64} {
  func.func @_bert_output_kernel(%arg0: i32, %arg1: memref<16x64xf32, #tpu.memory_space<vmem>>, %arg2: memref<64x32xf32, #tpu.memory_space<vmem>>, %arg3: memref<1x32xf32, #tpu.memory_space<vmem>>, %arg4: memref<16x32xf32, #tpu.memory_space<vmem>>, %arg5: memref<1x32xf32, #tpu.memory_space<vmem>>, %arg6: memref<1x32xf32, #tpu.memory_space<vmem>>, %arg7: memref<16x32xf32, #tpu.memory_space<vmem>>) attributes {dimension_semantics = [#tpu.dimension_semantics<parallel>], iteration_bounds = array<i64: 1>, scalar_prefetch = 0 : i64, scratch_operands = 0 : i64, tpu.core_type = #tpu.core_type<tc>, window_params = [{transform_indices = @transform_0, window_bounds = array<i64: 16, 64>}, {pipeline_mode = #tpu.pipeline_mode<synchronous>, transform_indices = @transform_1, window_bounds = array<i64: 64, 32>}, {pipeline_mode = #tpu.pipeline_mode<synchronous>, transform_indices = @transform_2, window_bounds = array<i64: 1, 32>}, {transform_indices = @transform_3, window_bounds = array<i64: 16, 32>}, {pipeline_mode = #tpu.pipeline_mode<synchronous>, transform_indices = @transform_4, window_bounds = array<i64: 1, 32>}, {pipeline_mode = #tpu.pipeline_mode<synchronous>, transform_indices = @transform_5, window_bounds = array<i64: 1, 32>}, {transform_indices = @transform_6, window_bounds = array<i64: 16, 32>}]} {
    %c0 = arith.constant 0 : index
    %c0_0 = arith.constant 0 : index
    %0 = vector.load %arg1[%c0, %c0_0] : memref<16x64xf32, #tpu.memory_space<vmem>>, vector<16x64xf32>
    %c0_1 = arith.constant 0 : index
    %c0_2 = arith.constant 0 : index
    %1 = vector.load %arg2[%c0_1, %c0_2] : memref<64x32xf32, #tpu.memory_space<vmem>>, vector<64x32xf32>
    %cst = arith.constant dense<0.000000e+00> : vector<16x32xf32>
    %2 = tpu.matmul %0, %1, %cst {dimension_numbers = #tpu.dot_dimension_numbers<[1], [0], [0], [1], [0, 0, 1, 1], [], []>} : vector<16x64xf32>, vector<64x32xf32>, vector<16x32xf32> -> vector<16x32xf32>
    %c0_3 = arith.constant 0 : index
    %c0_4 = arith.constant 0 : index
    %3 = vector.load %arg4[%c0_3, %c0_4] : memref<16x32xf32, #tpu.memory_space<vmem>>, vector<16x32xf32>
    %c0_5 = arith.constant 0 : index
    %c0_6 = arith.constant 0 : index
    %4 = vector.load %arg3[%c0_5, %c0_6] : memref<1x32xf32, #tpu.memory_space<vmem>>, vector<1x32xf32>
    %5 = vector.broadcast %4 : vector<1x32xf32> to vector<16x32xf32>
    %6 = arith.addf %3, %5 : vector<16x32xf32>
    %7 = arith.addf %2, %6 : vector<16x32xf32>
    %cst_7 = arith.constant dense<0.000000e+00> : vector<16xf32>
    %8 = vector.multi_reduction <add>, %7, %cst_7 [1] : vector<16x32xf32> to vector<16xf32>
    %9 = vector.shape_cast %8 : vector<16xf32> to vector<16x1xf32>
    %cst_8 = arith.constant 3.200000e+01 : f32
    %10 = vector.broadcast %cst_8 : f32 to vector<16x1xf32>
    %11 = arith.divf %9, %10 : vector<16x1xf32>
    %12 = vector.broadcast %11 : vector<16x1xf32> to vector<16x32xf32>
    %13 = arith.subf %7, %12 : vector<16x32xf32>
    %14 = arith.mulf %13, %13 : vector<16x32xf32>
    %cst_9 = arith.constant dense<0.000000e+00> : vector<16xf32>
    %15 = vector.multi_reduction <add>, %14, %cst_9 [1] : vector<16x32xf32> to vector<16xf32>
    %16 = vector.shape_cast %15 : vector<16xf32> to vector<16x1xf32>
    %cst_10 = arith.constant 3.200000e+01 : f32
    %17 = vector.broadcast %cst_10 : f32 to vector<16x1xf32>
    %18 = arith.divf %16, %17 : vector<16x1xf32>
    %cst_11 = arith.constant 9.99999996E-13 : f32
    %19 = vector.broadcast %cst_11 : f32 to vector<16x1xf32>
    %20 = arith.addf %18, %19 : vector<16x1xf32>
    %21 = math.rsqrt %20 : vector<16x1xf32>
    %22 = vector.broadcast %21 : vector<16x1xf32> to vector<16x32xf32>
    %23 = arith.mulf %13, %22 : vector<16x32xf32>
    %c0_12 = arith.constant 0 : index
    %c0_13 = arith.constant 0 : index
    %24 = vector.load %arg5[%c0_12, %c0_13] : memref<1x32xf32, #tpu.memory_space<vmem>>, vector<1x32xf32>
    %25 = vector.broadcast %24 : vector<1x32xf32> to vector<16x32xf32>
    %26 = arith.mulf %23, %25 : vector<16x32xf32>
    %c0_14 = arith.constant 0 : index
    %c0_15 = arith.constant 0 : index
    %27 = vector.load %arg6[%c0_14, %c0_15] : memref<1x32xf32, #tpu.memory_space<vmem>>, vector<1x32xf32>
    %28 = vector.broadcast %27 : vector<1x32xf32> to vector<16x32xf32>
    %29 = arith.addf %26, %28 : vector<16x32xf32>
    %c0_16 = arith.constant 0 : index
    %c0_17 = arith.constant 0 : index
    %30 = vector.load %arg7[%c0_16, %c0_17] : memref<16x32xf32, #tpu.memory_space<vmem>>, vector<16x32xf32>
    tpu.vector_store %arg7[%c0_16, %c0_17], %29 {strides = array<i32>} : memref<16x32xf32, #tpu.memory_space<vmem>>, vector<16x32xf32>,
    return
  }
  func.func @transform_0(%arg0: i32) -> (i32, i32) {
    %c0_i32 = arith.constant 0 : i32
    %c0_i32_0 = arith.constant 0 : i32
    return %arg0, %c0_i32 : i32, i32
  }
  func.func @transform_1(%arg0: i32) -> (i32, i32) {
    %c0_i32 = arith.constant 0 : i32
    %c0_i32_0 = arith.constant 0 : i32
    %c0_i32_1 = arith.constant 0 : i32
    return %c0_i32, %c0_i32_0 : i32, i32
  }
  func.func @transform_2(%arg0: i32) -> (i32, i32) {
    %c0_i32 = arith.constant 0 : i32
    %c0_i32_0 = arith.constant 0 : i32
    %c0_i32_1 = arith.constant 0 : i32
    return %c0_i32, %c0_i32_0 : i32, i32
  }
  func.func @transform_3(%arg0: i32) -> (i32, i32) {
    %c0_i32 = arith.constant 0 : i32
    %c0_i32_0 = arith.constant 0 : i32
    return %arg0, %c0_i32 : i32, i32
  }
  func.func @transform_4(%arg0: i32) -> (i32, i32) {
    %c0_i32 = arith.constant 0 : i32
    %c0_i32_0 = arith.constant 0 : i32
    %c0_i32_1 = arith.constant 0 : i32
    return %c0_i32, %c0_i32_0 : i32, i32
  }
  func.func @transform_5(%arg0: i32) -> (i32, i32) {
    %c0_i32 = arith.constant 0 : i32
    %c0_i32_0 = arith.constant 0 : i32
    %c0_i32_1 = arith.constant 0 : i32
    return %c0_i32, %c0_i32_0 : i32, i32
  }
  func.func @transform_6(%arg0: i32) -> (i32, i32) {
    %c0_i32 = arith.constant 0 : i32
    %c0_i32_0 = arith.constant 0 : i32
    return %arg0, %c0_i32 : i32, i32
  }
}

</mosaic_0001>

<llo_original>
// kernel: tpu_custom_call.1
$region0: #{tpu_custom_call.1}
  #allocation0 [shape = 'u32[]', space=smem, size = 0x4, offset = 0x4, fixed_abs, tag = 'smem constant byte address 0x4 - core index']
  #allocation1 [shape = 'u32[72,128]{1,0:T(1,128)}', space=vmem, size = 0x9000, scoped, tag = 'internal scratch']
  %s0 = inlined_call_operand.vmem [shape: f32[16,64], index: 0, kind: input, shape index: {}]
  %s1 = inlined_call_operand.vmem [shape: f32[64,32], index: 1, kind: input, shape index: {}]
  %s2 = inlined_call_operand.vmem [shape: f32[1,32], index: 2, kind: input, shape index: {}]
  %s3 = inlined_call_operand.vmem [shape: f32[16,32], index: 3, kind: input, shape index: {}]
  %s4 = inlined_call_operand.vmem [shape: f32[1,32], index: 4, kind: input, shape index: {}]
  %s5 = inlined_call_operand.vmem [shape: f32[1,32], index: 5, kind: input, shape index: {}]
  %s6 = inlined_call_operand.hbm [shape: f32[16,32], index: 6, kind: output, shape index: {}]
  %s7 = sld [smem:[#allocation0]]
  $region34: #{tpu_custom_call.1} parent=0
    _
  %s9 = ssub.s32 1, %s7
  %s10 = scalar_select 0, %s9, %s7
  $region1: #{tpu_custom_call.1} parent=0
    #allocation2 [shape = 'u8[8192]{0}', space=vmem, size = 0x2000, scoped, tag = 'output window, operand 0, single buffered']
    #allocation3 [shape = 's32[1]{0}', space=sflag, size = 0x4, scoped, tag = 'scoped memory for tpu_custom_call.1']
    %11 = vsyncpa [#allocation3], 0
    // Predicated region
    $region2: #{tpu_custom_call.1} parent=1 // pred_check
      _
    $region3: #{tpu_custom_call.1} parent=1 // pred_check_branch
      %13 = sbr.rel (0) target = $region5
    $region4: #{tpu_custom_call.1} parent=1 // pred_region
      _
    $region5: #{tpu_custom_call.1} parent=1 // pred_fallthru
      _
    // Predicated region
    $region6: #{tpu_custom_call.1} parent=1 // pred_check
      _
    $region7: #{tpu_custom_call.1} parent=1 // pred_check_branch
      %15 = sbr.rel (0) target = $region9
    $region8: #{tpu_custom_call.1} parent=1 // pred_region
      _
    $region9: #{tpu_custom_call.1} parent=1 // pred_fallthru
      _
    // Predicated region
    $region10: #{tpu_custom_call.1} parent=1 // pred_check
      _
    $region11: #{tpu_custom_call.1} parent=1 // pred_check_branch
      %17 = sbr.rel (0) target = $region13
    $region12: #{tpu_custom_call.1} parent=1 // pred_region
      _
    $region13: #{tpu_custom_call.1} parent=1 // pred_fallthru
      _
    // Predicated region
    $region14: #{tpu_custom_call.1} parent=1 // pred_check
      _
    $region15: #{tpu_custom_call.1} parent=1 // pred_check_branch
      %19 = sbr.rel (0) target = $region17
    $region16: #{tpu_custom_call.1} parent=1 // pred_region
      _
    $region17: #{tpu_custom_call.1} parent=1 // pred_fallthru
      _
    // Predicated region
    $region18: #{tpu_custom_call.1} parent=1 // pred_check
      _
    $region19: #{tpu_custom_call.1} parent=1 // pred_check_branch
      %21 = sbr.rel (0) target = $region21
    $region20: #{tpu_custom_call.1} parent=1 // pred_region
      _
    $region21: #{tpu_custom_call.1} parent=1 // pred_fallthru
      _
    // Predicated region
    $region22: #{tpu_custom_call.1} parent=1 // pred_check
      _
    $region23: #{tpu_custom_call.1} parent=1 // pred_check_branch
      %23 = sbr.rel (0) target = $region25
    $region24: #{tpu_custom_call.1} parent=1 // pred_region
      _
    $region25: #{tpu_custom_call.1} parent=1 // pred_fallthru
      _
    %v24 = vld [vmem:[%s0] sm:$0xff]
    %v25 = vld [vmem:[%s0 + $0x8] sm:$0xff]
    %v26 = vld [vmem:[%s1] sm:$0xff]
    %v27 = vld [vmem:[%s1 + $0x8] sm:$0xff]
    %v28 = vld [vmem:[%s1 + $0x10] sm:$0xff]
    %v29 = vld [vmem:[%s1 + $0x18] sm:$0xff]
    %v30 = vld [vmem:[%s1 + $0x20] sm:$0xff]
    %v31 = vld [vmem:[%s1 + $0x28] sm:$0xff]
    %v32 = vld [vmem:[%s1 + $0x30] sm:$0xff]
    %v33 = vld [vmem:[%s1 + $0x38] sm:$0xff]
    %v34 = vld [vmem:[%s3] sm:$0xff]
    %v35 = vld [vmem:[%s3 + $0x8] sm:$0xff]
    %v36 = vld [vmem:[%s2] sm:$0x1]
    %v38 = vperm.slane %v36, 0
    %v40 = vadd.f32 %v34, %v38
    %v41 = vadd.f32 %v35, %v38
    %vm42 = vcmask 523264
    %v44 = vsel %vm42, %v24, 0
    %v47 = vsel %vm42, %v25, 0
    %49 = vmatpush.msra.mxu0 0.0
    %50 = vmatpush.msra.mxu0 0.0
    %51 = vmatpush.msra.mxu0 0.0
    %52 = vmatpush.msra.mxu0 0.0
    %53 = vmatpush.msra.mxu0 0.0
    %54 = vmatpush.msra.mxu0 0.0
    %55 = vmatpush.msra.mxu0 0.0
    %56 = vmatpush.msra.mxu0 0.0
    %57 = vmatpush.msra.mxu0 %v33
    %58 = vmatpush.msra.mxu0 %v32
    %59 = vmatpush.msra.mxu0 %v31
    %60 = vmatpush.msra.mxu0 %v30
    %61 = vmatpush.msra.mxu0 %v29
    %62 = vmatpush.msra.mxu0 %v28
    %63 = vmatpush.msra.mxu0 %v27
    %64 = vmatpush.msra.mxu0 %v26
    %65 = vmatmul.f32.gmra.mxu0 %v44
    %v66 = vpop.f32.mrf.mxu0
    %v67 = vadd.f32 %v40, %v66
    %68 = vmatmul.f32.gmra.mxu0 %v47
    %v69 = vpop.f32.mrf.mxu0
    %v70 = vadd.f32 %v41, %v69
    %71 = vdwg.mxu0
    %vm72 = vcmask 261120
    %v73 = vsel %vm72, %v67, 0.0
    %74 = vadd.xlane.f32.xlu0 %v73
    %v75 = vpop.xlane.xlu0 %74
    %v76 = vsel %vm72, %v70, 0.0
    %77 = vadd.xlane.f32.xlu0 %v76
    %v78 = vpop.xlane.xlu0 %77
    %v79 = vrcp.pop 32.0
    %v80 = vmul.f32 32.0, %v79
    %v81 = vsub.f32 1.0, %v80
    %v82 = vmul.f32 %v79, %v81
    %v83 = vadd.f32 %v79, %v82
    %vm84 = vweird.f32 %v79
    %v85 = vsel %vm84, %v79, %v83
    %v86 = vmul.f32 %v75, %v85
    %v87 = vmul.f32 %v78, %v85
    %v88 = vsub.f32 %v67, %v86
    %v89 = vsub.f32 %v70, %v87
    %v90 = vmul.f32 %v88, %v88
    %v91 = vmul.f32 %v89, %v89
    %v92 = vsel %vm72, %v90, 0.0
    %93 = vadd.xlane.f32.xlu0 %v92
    %v94 = vpop.xlane.xlu0 %93
    %v95 = vsel %vm72, %v91, 0.0
    %96 = vadd.xlane.f32.xlu0 %v95
    %v97 = vpop.xlane.xlu0 %96
    %v98 = vmul.f32 %v94, %v85
    %v99 = vmul.f32 %v97, %v85
    %v100 = vadd.f32 %v98, 1e-12
    %v101 = vadd.f32 %v99, 1e-12
    %v102 = vrsqrt.pop %v100
    %v103 = vmul.f32 %v102, %v100
    %v104 = vmul.f32 %v103, %v102
    %v105 = vmul.f32 0.5, %v104
    %v106 = vsub.f32 1.5, %v105
    %v107 = vmul.f32 %v102, %v106
    %vm108 = vweird.f32 %v100
    %vm109 = vweird.f32 %v102
    %vm110 = vmor %vm108, %vm109
    %v111 = vsel %vm110, %v102, %v107
    %v112 = vrsqrt.pop %v101
    %v113 = vmul.f32 %v112, %v101
    %v114 = vmul.f32 %v113, %v112
    %v115 = vmul.f32 0.5, %v114
    %v116 = vsub.f32 1.5, %v115
    %v117 = vmul.f32 %v112, %v116
    %vm118 = vweird.f32 %v101
    %vm119 = vweird.f32 %v112
    %vm120 = vmor %vm118, %vm119
    %v121 = vsel %vm120, %v112, %v117
    %v122 = vmul.f32 %v88, %v111
    %v123 = vmul.f32 %v89, %v121
    %v124 = vld [vmem:[%s4] sm:$0x1]
    %v126 = vperm.slane %v124, 0
    %v128 = vmul.f32 %v122, %v126
    %v129 = vmul.f32 %v123, %v126
    %v130 = vld [vmem:[%s5] sm:$0x1]
    %v132 = vperm.slane %v130, 0
    %v134 = vadd.f32 %v128, %v132
    %v135 = vadd.f32 %v129, %v132
    %136 = vst.msk [vmem:[#allocation2] sm:$0xff] %vm72, %v134
    %137 = vst.msk [vmem:[#allocation2 + $0x8] sm:$0xff] %vm72, %v135
    // Predicated region
    $region26: #{tpu_custom_call.1} parent=1 // pred_check
      _
    $region27: #{tpu_custom_call.1} parent=1 // pred_check_branch
      %139 = sbr.rel (0) target = $region29
    $region28: #{tpu_custom_call.1} parent=1 // pred_region
      %141 = vsyncadd [#allocation3], 0
      %s142 = sshll.u32 [#allocation2], 4
      %s143 = int_to_ptr.vmem [resolvable:$true] %s142
      %s144 = sshll.u32 %s6, 4
      %s145 = int_to_ptr.hbm [resolvable:$true] %s144
      %150 = dma.vmem_to_hbm [thread:$0]  %s143, 256, %s145, [#allocation3], 128, 128, 8
    $region29: #{tpu_custom_call.1} parent=1 // pred_fallthru
      _
    // Predicated region
    $region30: #{tpu_custom_call.1} parent=1 // pred_check
      _
    $region31: #{tpu_custom_call.1} parent=1 // pred_check_branch
      %152 = sbr.rel (0) target = $region33
    $region32: #{tpu_custom_call.1} parent=1 // pred_region
      %154 = dma.done [#allocation3], 256
    $region33: #{tpu_custom_call.1} parent=1 // pred_fallthru
      _
    %155 = vsyncpa [#allocation3], 1

// kernel: tpu_custom_call.1
$region0: #{tpu_custom_call.1}
  #allocation0 [shape = 'u32[]', space=smem, size = 0x4, offset = 0x4, fixed_abs, tag = 'smem constant byte address 0x4 - core index']
  #allocation1 [shape = 'u32[72,128]{1,0:T(1,128)}', space=vmem, size = 0x9000, scoped, tag = 'internal scratch']
  %s0 = inlined_call_operand.vmem [shape: f32[16,64], index: 0, kind: input, shape index: {}]
  %s1 = inlined_call_operand.vmem [shape: f32[64,32], index: 1, kind: input, shape index: {}]
  %s2 = inlined_call_operand.vmem [shape: f32[1,32], index: 2, kind: input, shape index: {}]
  %s3 = inlined_call_operand.vmem [shape: f32[16,32], index: 3, kind: input, shape index: {}]
  %s4 = inlined_call_operand.vmem [shape: f32[1,32], index: 4, kind: input, shape index: {}]
  %s5 = inlined_call_operand.vmem [shape: f32[1,32], index: 5, kind: input, shape index: {}]
  %s6 = inlined_call_operand.hbm [shape: f32[16,32], index: 6, kind: output, shape index: {}]
  %s7 = sld [smem:[#allocation0]]
  $region34: #{tpu_custom_call.1} parent=0
    _
  %s9 = ssub.s32 1, %s7
  %s10 = scalar_select 0, %s9, %s7
  $region1: #{tpu_custom_call.1} parent=0
    #allocation2 [shape = 'u8[8192]{0}', space=vmem, size = 0x2000, scoped, tag = 'output window, operand 0, single buffered']
    #allocation3 [shape = 's32[1]{0}', space=sflag, size = 0x4, scoped, tag = 'scoped memory for tpu_custom_call.1']
    %11 = vsyncpa [#allocation3], 0
    // Predicated region
    $region2: #{tpu_custom_call.1} parent=1 // pred_check
      _
    $region3: #{tpu_custom_call.1} parent=1 // pred_check_branch
      %13 = sbr.rel (0) target = $region5
    $region4: #{tpu_custom_call.1} parent=1 // pred_region
      _
    $region5: #{tpu_custom_call.1} parent=1 // pred_fallthru
      _
    // Predicated region
    $region6: #{tpu_custom_call.1} parent=1 // pred_check
      _
    $region7: #{tpu_custom_call.1} parent=1 // pred_check_branch
      %15 = sbr.rel (0) target = $region9
    $region8: #{tpu_custom_call.1} parent=1 // pred_region
      _
    $region9: #{tpu_custom_call.1} parent=1 // pred_fallthru
      _
    // Predicated region
    $region10: #{tpu_custom_call.1} parent=1 // pred_check
      _
    $region11: #{tpu_custom_call.1} parent=1 // pred_check_branch
      %17 = sbr.rel (0) target = $region13
    $region12: #{tpu_custom_call.1} parent=1 // pred_region
      _
    $region13: #{tpu_custom_call.1} parent=1 // pred_fallthru
      _
    // Predicated region
    $region14: #{tpu_custom_call.1} parent=1 // pred_check
      _
    $region15: #{tpu_custom_call.1} parent=1 // pred_check_branch
      %19 = sbr.rel (0) target = $region17
    $region16: #{tpu_custom_call.1} parent=1 // pred_region
      _
    $region17: #{tpu_custom_call.1} parent=1 // pred_fallthru
      _
    // Predicated region
    $region18: #{tpu_custom_call.1} parent=1 // pred_check
      _
    $region19: #{tpu_custom_call.1} parent=1 // pred_check_branch
      %21 = sbr.rel (0) target = $region21
    $region20: #{tpu_custom_call.1} parent=1 // pred_region
      _
    $region21: #{tpu_custom_call.1} parent=1 // pred_fallthru
      _
    // Predicated region
    $region22: #{tpu_custom_call.1} parent=1 // pred_check
      _
    $region23: #{tpu_custom_call.1} parent=1 // pred_check_branch
      %23 = sbr.rel (0) target = $region25
    $region24: #{tpu_custom_call.1} parent=1 // pred_region
      _
    $region25: #{tpu_custom_call.1} parent=1 // pred_fallthru
      _
    %v24 = vld [vmem:[%s0] sm:$0xff]
    %v25 = vld [vmem:[%s0 + $0x8] sm:$0xff]
    %v26 = vld [vmem:[%s1] sm:$0xff]
    %v27 = vld [vmem:[%s1 + $0x8] sm:$0xff]
    %v28 = vld [vmem:[%s1 + $0x10] sm:$0xff]
    %v29 = vld [vmem:[%s1 + $0x18] sm:$0xff]
    %v30 = vld [vmem:[%s1 + $0x20] sm:$0xff]
    %v31 = vld [vmem:[%s1 + $0x28] sm:$0xff]
    %v32 = vld [vmem:[%s1 + $0x30] sm:$0xff]
    %v33 = vld [vmem:[%s1 + $0x38] sm:$0xff]
    %v34 = vld [vmem:[%s3] sm:$0xff]
    %v35 = vld [vmem:[%s3 + $0x8] sm:$0xff]
    %v36 = vld [vmem:[%s2] sm:$0x1]
    %v38 = vperm.slane %v36, 0
    %v40 = vadd.f32 %v34, %v38
    %v41 = vadd.f32 %v35, %v38
    %vm42 = vcmask 523264
    %v44 = vsel %vm42, %v24, 0
    %v47 = vsel %vm42, %v25, 0
    %49 = vmatpush.msra.mxu0 0.0
    %50 = vmatpush.msra.mxu0 0.0
    %51 = vmatpush.msra.mxu0 0.0
    %52 = vmatpush.msra.mxu0 0.0
    %53 = vmatpush.msra.mxu0 0.0
    %54 = vmatpush.msra.mxu0 0.0
    %55 = vmatpush.msra.mxu0 0.0
    %56 = vmatpush.msra.mxu0 0.0
    %57 = vmatpush.msra.mxu0 %v33
    %58 = vmatpush.msra.mxu0 %v32
    %59 = vmatpush.msra.mxu0 %v31
    %60 = vmatpush.msra.mxu0 %v30
    %61 = vmatpush.msra.mxu0 %v29
    %62 = vmatpush.msra.mxu0 %v28
    %63 = vmatpush.msra.mxu0 %v27
    %64 = vmatpush.msra.mxu0 %v26
    %65 = vmatmul.f32.gmra.mxu0 %v44
    %v66 = vpop.f32.mrf.mxu0
    %v67 = vadd.f32 %v40, %v66
    %68 = vmatmul.f32.gmra.mxu0 %v47
    %v69 = vpop.f32.mrf.mxu0
    %v70 = vadd.f32 %v41, %v69
    %71 = vdwg.mxu0
    %vm72 = vcmask 261120
    %v73 = vsel %vm72, %v67, 0.0
    %74 = vadd.xlane.f32.xlu0 %v73
    %v75 = vpop.xlane.xlu0 %74
    %v76 = vsel %vm72, %v70, 0.0
    %77 = vadd.xlane.f32.xlu0 %v76
    %v78 = vpop.xlane.xlu0 %77
    %v79 = vrcp.pop 32.0
    %v80 = vmul.f32 32.0, %v79
    %v81 = vsub.f32 1.0, %v80
    %v82 = vmul.f32 %v79, %v81
    %v83 = vadd.f32 %v79, %v82
    %vm84 = vweird.f32 %v79
    %v85 = vsel %vm84, %v79, %v83
    %v86 = vmul.f32 %v75, %v85
    %v87 = vmul.f32 %v78, %v85
    %v88 = vsub.f32 %v67, %v86
    %v89 = vsub.f32 %v70, %v87
    %v90 = vmul.f32 %v88, %v88
    %v91 = vmul.f32 %v89, %v89
    %v92 = vsel %vm72, %v90, 0.0
    %93 = vadd.xlane.f32.xlu0 %v92
    %v94 = vpop.xlane.xlu0 %93
    %v95 = vsel %vm72, %v91, 0.0
    %96 = vadd.xlane.f32.xlu0 %v95
    %v97 = vpop.xlane.xlu0 %96
    %v98 = vmul.f32 %v94, %v85
    %v99 = vmul.f32 %v97, %v85
    %v100 = vadd.f32 %v98, 1e-12
    %v101 = vadd.f32 %v99, 1e-12
    %v102 = vrsqrt.pop %v100
    %v103 = vmul.f32 %v102, %v100
    %v104 = vmul.f32 %v103, %v102
    %v105 = vmul.f32 0.5, %v104
    %v106 = vsub.f32 1.5, %v105
    %v107 = vmul.f32 %v102, %v106
    %vm108 = vweird.f32 %v100
    %vm109 = vweird.f32 %v102
    %vm110 = vmor %vm108, %vm109
    %v111 = vsel %vm110, %v102, %v107
    %v112 = vrsqrt.pop %v101
    %v113 = vmul.f32 %v112, %v101
    %v114 = vmul.f32 %v113, %v112
    %v115 = vmul.f32 0.5, %v114
    %v116 = vsub.f32 1.5, %v115
    %v117 = vmul.f32 %v112, %v116
    %vm118 = vweird.f32 %v101
    %vm119 = vweird.f32 %v112
    %vm120 = vmor %vm118, %vm119
    %v121 = vsel %vm120, %v112, %v117
    %v122 = vmul.f32 %v88, %v111
    %v123 = vmul.f32 %v89, %v121
    %v124 = vld [vmem:[%s4] sm:$0x1]
    %v126 = vperm.slane %v124, 0
    %v128 = vmul.f32 %v122, %v126
    %v129 = vmul.f32 %v123, %v126
    %v130 = vld [vmem:[%s5] sm:$0x1]
    %v132 = vperm.slane %v130, 0
    %v134 = vadd.f32 %v128, %v132
    %v135 = vadd.f32 %v129, %v132
    %136 = vst.msk [vmem:[#allocation2] sm:$0xff] %vm72, %v134
    %137 = vst.msk [vmem:[#allocation2 + $0x8] sm:$0xff] %vm72, %v135
    // Predicated region
    $region26: #{tpu_custom_call.1} parent=1 // pred_check
      _
    $region27: #{tpu_custom_call.1} parent=1 // pred_check_branch
      %139 = sbr.rel (0) target = $region29
    $region28: #{tpu_custom_call.1} parent=1 // pred_region
      %141 = vsyncadd [#allocation3], 0
      %s142 = sshll.u32 [#allocation2], 4
      %s143 = int_to_ptr.vmem [resolvable:$true] %s142
      %s144 = sshll.u32 %s6, 4
      %s145 = int_to_ptr.hbm [resolvable:$true] %s144
      %150 = dma.vmem_to_hbm [thread:$0]  %s143, 256, %s145, [#allocation3], 128, 128, 8
    $region29: #{tpu_custom_call.1} parent=1 // pred_fallthru
      _
    // Predicated region
    $region30: #{tpu_custom_call.1} parent=1 // pred_check
      _
    $region31: #{tpu_custom_call.1} parent=1 // pred_check_branch
      %152 = sbr.rel (0) target = $region33
    $region32: #{tpu_custom_call.1} parent=1 // pred_region
      %154 = dma.done [#allocation3], 256
    $region33: #{tpu_custom_call.1} parent=1 // pred_fallthru
      _
    %155 = vsyncpa [#allocation3], 1

</llo_original>
